<compile_context>
chip_gen: v6e
topology: v6e:2x2x1
jax: 0.10.0
libtpu: 0.0.40
codegen_flags: <defaults>
</compile_context>

<pallas_src>
import jax
import jax.numpy as jnp
from jax import lax
from jax.experimental import pallas as pl
from jax.experimental.pallas import tpu as pltpu


def narx_kernel(x_ref, w1_ref, b1_ref, w2_ref, b2_ref, w3_ref, b3_ref, o_ref):
    # x_ref: [T, 4] (batch rows in sublanes, natural HBM layout)
    # w_i:   [out, in]   b_i: [out, 1]   o_ref: [1, T] (lane-dense in batch)
    x = x_ref[...]

    # Layer 1: contract the feature axis of both operands -> [30, T].
    # Mosaic does the [T,4]->[4,T] relayout on-chip; batch ends up in lanes.
    z = lax.dot_general(
        w1_ref[...], x,
        dimension_numbers=(((1,), (1,)), ((), ())),
        preferred_element_type=jnp.float32,
    )
    z = jnp.tanh(z + b1_ref[...])

    # Layer 2: (30,30) @ (30,T) -> [30, T], lane-dense tanh.
    z = jnp.dot(w2_ref[...], z, preferred_element_type=jnp.float32)
    z = jnp.tanh(z + b2_ref[...])

    # Layer 3: (1,30) @ (30,T) -> [1, T], unmasked lane-dense store.
    z = jnp.dot(w3_ref[...], z, preferred_element_type=jnp.float32)
    o_ref[...] = z + b3_ref[...]


def prepare_params(w1, b1, w2, b2, w3, b3):
    """One-time conversion from PyTorch layout (w [out,in], b [out]) to the
    kernel layout: weights unchanged, biases as [out, 1] columns so they
    broadcast along the lane (batch) axis inside the kernel."""
    return (w1, b1.reshape(-1, 1),
            w2, b2.reshape(-1, 1),
            w3, b3.reshape(-1, 1))


def _round_up(v, m):
    return ((v + m - 1) // m) * m


def _pick_tile(n, tile_n):
    """Lane tile over the batch dim.

    * Small batches: one full-extent tile (any n is a legal block shape).
    * Otherwise: tiles are multiples of 128 (unmasked lane-dense stores),
      capped at tile_n (VMEM budget, v7x-safe), and the tile count is forced
      to be >= 2 and even so the "parallel" grid axis feeds both v7x cores.
    Ragged tail blocks are fine: Pallas masks out-of-range reads/writes.
    """
    if n <= 512:
        return n, 1
    tile_n = max(128, (tile_n // 128) * 128)
    num = max(2, pl.cdiv(n, tile_n))
    if num % 2:
        num += 1
    tile = min(tile_n, _round_up(pl.cdiv(n, num), 128))
    return tile, pl.cdiv(n, tile)


def narx_forward(x, w1, b1c, w2, b2c, w3, b3c, *, tile_n=32768):
    """x: [N, 4] float32 (natural layout, no wrapper transpose/pad).
    Weights [out, in]; biases already [out, 1] (use prepare_params once)."""
    n = x.shape[0]
    tile, num_tiles = _pick_tile(n, tile_n)

    # Weights/biases: full-shape blocks with a constant index_map -> fetched
    # once, VMEM-resident across all grid steps.
    param_spec = lambda a: pl.BlockSpec(a.shape, lambda i: (0, 0))

    n_params = 30 * 4 + 30 + 30 * 30 + 30 + 30 + 1
    cost = pl.CostEstimate(
        flops=2 * n * (4 * 30 + 30 * 30 + 30 * 1),
        transcendentals=60 * n,
        bytes_accessed=(n * 4 + n + n_params) * 4,
    )

    out = pl.pallas_call(
        narx_kernel,
        out_shape=jax.ShapeDtypeStruct((1, n), jnp.float32),
        grid=(num_tiles,),
        in_specs=[
            pl.BlockSpec((tile, 4), lambda i: (i, 0)),   # x tile, pipelined over N
            param_spec(w1), param_spec(b1c),
            param_spec(w2), param_spec(b2c),
            param_spec(w3), param_spec(b3c),
        ],
        out_specs=pl.BlockSpec((1, tile), lambda i: (0, i)),
        compiler_params=pltpu.CompilerParams(
            dimension_semantics=("parallel",),
            # ~10-12 MiB live at tile=32768 (x/out double-buffers + two [30,T]
            # f32 intermediates); 48 MiB leaves headroom yet fits v7x (64 MiB).
            vmem_limit_bytes=48 * 1024 * 1024,
        ),
        cost_estimate=cost,
    )(x, w1, b1c, w2, b2c, w3, b3c)

    # Back to the PyTorch [N, 1] convention (tiny copy; keep module contract).
    return out[0, :].reshape(n, 1)


def init_params(key):
    """Deterministic init mimicking nn.Linear default: U(-1/sqrt(fan_in), 1/sqrt(fan_in)).
    Returns PyTorch-style params: w [out, in], b [out]."""
    def linear(key, out_f, in_f):
        kw, kb = jax.random.split(key)
        bound = 1.0 / jnp.sqrt(jnp.float32(in_f))
        w = jax.random.uniform(kw, (out_f, in_f), jnp.float32, -bound, bound)
        b = jax.random.uniform(kb, (out_f,), jnp.float32, -bound, bound)
        return w, b

    k1, k2, k3 = jax.random.split(key, 3)
    w1, b1 = linear(k1, 30, 4)
    w2, b2 = linear(k2, 30, 30)
    w3, b3 = linear(k3, 1, 30)
    return w1, b1, w2, b2, w3, b3


def narx_reference(x, w1, b1, w2, b2, w3, b3):
    z = jnp.tanh(x @ w1.T + b1)
    z = jnp.tanh(z @ w2.T + b2)
    return z @ w3.T + b3


if __name__ == "__main__":
    key = jax.random.PRNGKey(0)
    kx, kp = jax.random.split(key)

    # Small batch of regressor rows, each with 4 lagged features (matches the
    # NARX module's Linear(4, 30) input).
    N = 8
    x = jax.random.normal(kx, (N, 4), jnp.float32)

    params = init_params(kp)                  # PyTorch layout
    kernel_params = prepare_params(*params)   # hoisted one-time bias reshape

    out = jax.block_until_ready(narx_forward(x, *kernel_params))
    ref = narx_reference(x, *params)
    assert out.shape == (N, 1), out.shape
    assert jnp.allclose(out, ref, atol=1e-5, rtol=1e-5), "mismatch vs JAX reference"

    # Exercise the multi-tile (2 parallel grid steps) + ragged-tail path.
    N2 = 3000
    x2 = jax.random.normal(jax.random.PRNGKey(1), (N2, 4), jnp.float32)
    out2 = jax.block_until_ready(narx_forward(x2, *kernel_params))
    ref2 = narx_reference(x2, *params)
    assert out2.shape == (N2, 1), out2.shape
    assert jnp.allclose(out2, ref2, atol=1e-4, rtol=1e-4), "mismatch on multi-tile batch"

    print("KERNEL_OK")
</pallas_src>

<mosaic_0001>
module attributes {stable_mosaic.version = 11 : i64} {
  func.func @narx_kernel(%arg0: i32, %arg1: memref<8x4xf32, #tpu.memory_space<vmem>>, %arg2: memref<30x4xf32, #tpu.memory_space<vmem>>, %arg3: memref<30x1xf32, #tpu.memory_space<vmem>>, %arg4: memref<30x30xf32, #tpu.memory_space<vmem>>, %arg5: memref<30x1xf32, #tpu.memory_space<vmem>>, %arg6: memref<1x30xf32, #tpu.memory_space<vmem>>, %arg7: memref<1x1xf32, #tpu.memory_space<vmem>>, %arg8: memref<1x8xf32, #tpu.memory_space<vmem>>) attributes {dimension_semantics = [#tpu.dimension_semantics<parallel>], iteration_bounds = array<i64: 1>, scalar_prefetch = 0 : i64, scratch_operands = 0 : i64, tpu.core_type = #tpu.core_type<tc>, window_params = [{transform_indices = @transform_0, window_bounds = array<i64: 8, 4>}, {pipeline_mode = #tpu.pipeline_mode<synchronous>, transform_indices = @transform_1, window_bounds = array<i64: 30, 4>}, {pipeline_mode = #tpu.pipeline_mode<synchronous>, transform_indices = @transform_2, window_bounds = array<i64: 30, 1>}, {pipeline_mode = #tpu.pipeline_mode<synchronous>, transform_indices = @transform_3, window_bounds = array<i64: 30, 30>}, {pipeline_mode = #tpu.pipeline_mode<synchronous>, transform_indices = @transform_4, window_bounds = array<i64: 30, 1>}, {pipeline_mode = #tpu.pipeline_mode<synchronous>, transform_indices = @transform_5, window_bounds = array<i64: 1, 30>}, {pipeline_mode = #tpu.pipeline_mode<synchronous>, transform_indices = @transform_6, window_bounds = array<i64: 1, 1>}, {transform_indices = @transform_7, window_bounds = array<i64: 1, 8>}]} {
    %c0 = arith.constant 0 : index
    %c0_0 = arith.constant 0 : index
    %0 = vector.load %arg1[%c0, %c0_0] : memref<8x4xf32, #tpu.memory_space<vmem>>, vector<8x4xf32>
    %c0_1 = arith.constant 0 : index
    %c0_2 = arith.constant 0 : index
    %1 = vector.load %arg2[%c0_1, %c0_2] : memref<30x4xf32, #tpu.memory_space<vmem>>, vector<30x4xf32>
    %cst = arith.constant dense<0.000000e+00> : vector<30x8xf32>
    %2 = tpu.matmul %1, %0, %cst {dimension_numbers = #tpu.dot_dimension_numbers<[1], [1], [0], [0], [0, 0, 1, 0], [], []>} : vector<30x4xf32>, vector<8x4xf32>, vector<30x8xf32> -> vector<30x8xf32>
    %c0_3 = arith.constant 0 : index
    %c0_4 = arith.constant 0 : index
    %3 = vector.load %arg3[%c0_3, %c0_4] : memref<30x1xf32, #tpu.memory_space<vmem>>, vector<30x1xf32>
    %4 = vector.broadcast %3 : vector<30x1xf32> to vector<30x8xf32>
    %5 = arith.addf %2, %4 : vector<30x8xf32>
    %6 = math.tanh %5 : vector<30x8xf32>
    %c0_5 = arith.constant 0 : index
    %c0_6 = arith.constant 0 : index
    %7 = vector.load %arg4[%c0_5, %c0_6] : memref<30x30xf32, #tpu.memory_space<vmem>>, vector<30x30xf32>
    %cst_7 = arith.constant dense<0.000000e+00> : vector<30x8xf32>
    %8 = tpu.matmul %7, %6, %cst_7 {dimension_numbers = #tpu.dot_dimension_numbers<[1], [0], [0], [1], [0, 0, 1, 1], [], []>} : vector<30x30xf32>, vector<30x8xf32>, vector<30x8xf32> -> vector<30x8xf32>
    %c0_8 = arith.constant 0 : index
    %c0_9 = arith.constant 0 : index
    %9 = vector.load %arg5[%c0_8, %c0_9] : memref<30x1xf32, #tpu.memory_space<vmem>>, vector<30x1xf32>
    %10 = vector.broadcast %9 : vector<30x1xf32> to vector<30x8xf32>
    %11 = arith.addf %8, %10 : vector<30x8xf32>
    %12 = math.tanh %11 : vector<30x8xf32>
    %c0_10 = arith.constant 0 : index
    %c0_11 = arith.constant 0 : index
    %13 = vector.load %arg6[%c0_10, %c0_11] : memref<1x30xf32, #tpu.memory_space<vmem>>, vector<1x30xf32>
    %cst_12 = arith.constant dense<0.000000e+00> : vector<1x8xf32>
    %14 = tpu.matmul %13, %12, %cst_12 {dimension_numbers = #tpu.dot_dimension_numbers<[1], [0], [0], [1], [0, 0, 1, 1], [], []>} : vector<1x30xf32>, vector<30x8xf32>, vector<1x8xf32> -> vector<1x8xf32>
    %c0_13 = arith.constant 0 : index
    %c0_14 = arith.constant 0 : index
    %15 = vector.load %arg7[%c0_13, %c0_14] : memref<1x1xf32, #tpu.memory_space<vmem>>, vector<1x1xf32>
    %16 = vector.broadcast %15 : vector<1x1xf32> to vector<1x8xf32>
    %17 = arith.addf %14, %16 : vector<1x8xf32>
    %c0_15 = arith.constant 0 : index
    %c0_16 = arith.constant 0 : index
    %18 = vector.load %arg8[%c0_15, %c0_16] : memref<1x8xf32, #tpu.memory_space<vmem>>, vector<1x8xf32>
    tpu.vector_store %arg8[%c0_15, %c0_16], %17 {strides = array<i32>} : memref<1x8xf32, #tpu.memory_space<vmem>>, vector<1x8xf32>,
    return
  }
  func.func @transform_0(%arg0: i32) -> (i32, i32) {
    %c0_i32 = arith.constant 0 : i32
    %c0_i32_0 = arith.constant 0 : i32
    return %arg0, %c0_i32 : i32, i32
  }
  func.func @transform_1(%arg0: i32) -> (i32, i32) {
    %c0_i32 = arith.constant 0 : i32
    %c0_i32_0 = arith.constant 0 : i32
    %c0_i32_1 = arith.constant 0 : i32
    return %c0_i32, %c0_i32_0 : i32, i32
  }
  func.func @transform_2(%arg0: i32) -> (i32, i32) {
    %c0_i32 = arith.constant 0 : i32
    %c0_i32_0 = arith.constant 0 : i32
    %c0_i32_1 = arith.constant 0 : i32
    return %c0_i32, %c0_i32_0 : i32, i32
  }
  func.func @transform_3(%arg0: i32) -> (i32, i32) {
    %c0_i32 = arith.constant 0 : i32
    %c0_i32_0 = arith.constant 0 : i32
    %c0_i32_1 = arith.constant 0 : i32
    return %c0_i32, %c0_i32_0 : i32, i32
  }
  func.func @transform_4(%arg0: i32) -> (i32, i32) {
    %c0_i32 = arith.constant 0 : i32
    %c0_i32_0 = arith.constant 0 : i32
    %c0_i32_1 = arith.constant 0 : i32
    return %c0_i32, %c0_i32_0 : i32, i32
  }
  func.func @transform_5(%arg0: i32) -> (i32, i32) {
    %c0_i32 = arith.constant 0 : i32
    %c0_i32_0 = arith.constant 0 : i32
    %c0_i32_1 = arith.constant 0 : i32
    return %c0_i32, %c0_i32_0 : i32, i32
  }
  func.func @transform_6(%arg0: i32) -> (i32, i32) {
    %c0_i32 = arith.constant 0 : i32
    %c0_i32_0 = arith.constant 0 : i32
    %c0_i32_1 = arith.constant 0 : i32
    return %c0_i32, %c0_i32_0 : i32, i32
  }
  func.func @transform_7(%arg0: i32) -> (i32, i32) {
    %c0_i32 = arith.constant 0 : i32
    %c0_i32_0 = arith.constant 0 : i32
    return %c0_i32, %arg0 : i32, i32
  }
}

</mosaic_0001>

<llo_original>
// kernel: tpu_custom_call.1
$region0: #{tpu_custom_call.1}
  #allocation0 [shape = 'u32[]', space=smem, size = 0x4, offset = 0x4, fixed_abs, tag = 'smem constant byte address 0x4 - core index']
  #allocation1 [shape = 'u32[144,128]{1,0:T(1,128)}', space=vmem, size = 0x12000, scoped, tag = 'internal scratch']
  #allocation2 [shape = 'f32[1,1]{1,0:T(1,128)S(1)}', space=vmem, size = 0x200, scoped, tag = 'scoped memory for tpu_custom_call.1']
  %s0 = inlined_call_operand.vmem [shape: f32[8,4], index: 0, kind: input, shape index: {}]
  %s1 = inlined_call_operand.vmem [shape: f32[30,4], index: 1, kind: input, shape index: {}]
  %s2 = inlined_call_operand.vmem [shape: f32[30,1], index: 2, kind: input, shape index: {}]
  %s3 = inlined_call_operand.vmem [shape: f32[30,30], index: 3, kind: input, shape index: {}]
  %s4 = inlined_call_operand.vmem [shape: f32[30,1], index: 4, kind: input, shape index: {}]
  %s5 = inlined_call_operand.vmem [shape: f32[1,30], index: 5, kind: input, shape index: {}]
  %s6 = inlined_call_operand.<no memory space> [shape: f32[1,1], index: 6, kind: input, shape index: {}]
  %s7 = inlined_call_operand.hbm [shape: f32[1,8], index: 7, kind: output, shape index: {}]
  %s8 = sld [smem:[#allocation0]]
  $region38: #{tpu_custom_call.1} parent=0
    _
  %s10 = ssub.s32 1, %s8
  %s11 = scalar_select 0, %s10, %s8
  %v12 = vstv %s6
  %13 = vst [vmem:[#allocation2] sm:$0x1] %v12
  $region1: #{tpu_custom_call.1} parent=0
    #allocation3 [shape = 'u8[512]{0}', space=vmem, size = 0x400, scoped, tag = 'output window, operand 0, single buffered']
    #allocation4 [shape = 's32[1]{0}', space=sflag, size = 0x4, scoped, tag = 'scoped memory for tpu_custom_call.1']
    %14 = vsyncpa [#allocation4], 0
    // Predicated region
    $region2: #{tpu_custom_call.1} parent=1 // pred_check
      _
    $region3: #{tpu_custom_call.1} parent=1 // pred_check_branch
      %16 = sbr.rel (0) target = $region5
    $region4: #{tpu_custom_call.1} parent=1 // pred_region
      _
    $region5: #{tpu_custom_call.1} parent=1 // pred_fallthru
      _
    // Predicated region
    $region6: #{tpu_custom_call.1} parent=1 // pred_check
      _
    $region7: #{tpu_custom_call.1} parent=1 // pred_check_branch
      %18 = sbr.rel (0) target = $region9
    $region8: #{tpu_custom_call.1} parent=1 // pred_region
      _
    $region9: #{tpu_custom_call.1} parent=1 // pred_fallthru
      _
    // Predicated region
    $region10: #{tpu_custom_call.1} parent=1 // pred_check
      _
    $region11: #{tpu_custom_call.1} parent=1 // pred_check_branch
      %20 = sbr.rel (0) target = $region13
    $region12: #{tpu_custom_call.1} parent=1 // pred_region
      _
    $region13: #{tpu_custom_call.1} parent=1 // pred_fallthru
      _
    // Predicated region
    $region14: #{tpu_custom_call.1} parent=1 // pred_check
      _
    $region15: #{tpu_custom_call.1} parent=1 // pred_check_branch
      %22 = sbr.rel (0) target = $region17
    $region16: #{tpu_custom_call.1} parent=1 // pred_region
      _
    $region17: #{tpu_custom_call.1} parent=1 // pred_fallthru
      _
    // Predicated region
    $region18: #{tpu_custom_call.1} parent=1 // pred_check
      _
    $region19: #{tpu_custom_call.1} parent=1 // pred_check_branch
      %24 = sbr.rel (0) target = $region21
    $region20: #{tpu_custom_call.1} parent=1 // pred_region
      _
    $region21: #{tpu_custom_call.1} parent=1 // pred_fallthru
      _
    // Predicated region
    $region22: #{tpu_custom_call.1} parent=1 // pred_check
      _
    $region23: #{tpu_custom_call.1} parent=1 // pred_check_branch
      %26 = sbr.rel (0) target = $region25
    $region24: #{tpu_custom_call.1} parent=1 // pred_region
      _
    $region25: #{tpu_custom_call.1} parent=1 // pred_fallthru
      _
    // Predicated region
    $region26: #{tpu_custom_call.1} parent=1 // pred_check
      _
    $region27: #{tpu_custom_call.1} parent=1 // pred_check_branch
      %28 = sbr.rel (0) target = $region29
    $region28: #{tpu_custom_call.1} parent=1 // pred_region
      _
    $region29: #{tpu_custom_call.1} parent=1 // pred_fallthru
      _
    %v29 = vld [vmem:[%s0] sm:$0xff]
    %v30 = vld [vmem:[%s1] sm:$0xff]
    %v31 = vld [vmem:[%s1 + $0x8] sm:$0xff]
    %v32 = vld [vmem:[%s1 + $0x10] sm:$0xff]
    %v33 = vld [vmem:[%s1 + $0x18] sm:$0x3f]
    %v34 = vld [vmem:[%s2] sm:$0xff]
    %v35 = vld [vmem:[%s2 + $0x8] sm:$0xff]
    %v36 = vld [vmem:[%s2 + $0x10] sm:$0xff]
    %v37 = vld [vmem:[%s2 + $0x18] sm:$0x3f]
    %39 = vset.pattern.permute.xlu0 0
    %40 = vperm.xlu0 %39, %v34
    %v41 = vpop.permute.xlu0 %40
    %44 = vset.pattern.permute.xlu0 0
    %45 = vperm.xlu0 %44, %v35
    %v46 = vpop.permute.xlu0 %45
    %49 = vset.pattern.permute.xlu0 0
    %50 = vperm.xlu0 %49, %v36
    %v51 = vpop.permute.xlu0 %50
    %54 = vset.pattern.permute.xlu0 0
    %55 = vperm.xlu0 %54, %v37
    %v56 = vpop.permute.xlu0 %55
    %vm58 = vcmask 31744
    %v60 = vsel %vm58, %v30, 0
    %v63 = vsel %vm58, %v31, 0
    %v66 = vsel %vm58, %v32, 0
    %v69 = vsel %vm58, %v33, 0
    %v72 = vsel %vm58, %v29, 0
    %74 = vmatprep.subr.mxu0 0.0
    %75 = vmatpush1.xpose.msra.mxu0 0.0
    %76 = vmatprep.subr.mxu0 0.0
    %77 = vmatpush1.xpose.msra.mxu0 0.0
    %78 = vmatprep.subr.mxu0 0.0
    %79 = vmatpush1.xpose.msra.mxu0 0.0
    %80 = vmatprep.subr.mxu0 0.0
    %81 = vmatpush1.xpose.msra.mxu0 0.0
    %82 = vmatprep.subr.mxu0 0.0
    %83 = vmatpush1.xpose.msra.mxu0 0.0
    %84 = vmatprep.subr.mxu0 0.0
    %85 = vmatpush1.xpose.msra.mxu0 0.0
    %86 = vmatprep.subr.mxu0 0.0
    %87 = vmatpush1.xpose.msra.mxu0 0.0
    %88 = vmatprep.subr.mxu0 0.0
    %89 = vmatpush1.xpose.msra.mxu0 0.0
    %90 = vmatprep.subr.mxu0 0.0
    %91 = vmatpush1.xpose.msra.mxu0 0.0
    %92 = vmatprep.subr.mxu0 0.0
    %93 = vmatpush1.xpose.msra.mxu0 0.0
    %94 = vmatprep.subr.mxu0 0.0
    %95 = vmatpush1.xpose.msra.mxu0 0.0
    %96 = vmatprep.subr.mxu0 0.0
    %97 = vmatpush1.xpose.msra.mxu0 0.0
    %98 = vmatprep.subr.mxu0 0.0
    %99 = vmatpush1.xpose.msra.mxu0 0.0
    %100 = vmatprep.subr.mxu0 0.0
    %101 = vmatpush1.xpose.msra.mxu0 0.0
    %102 = vmatprep.subr.mxu0 0.0
    %103 = vmatpush1.xpose.msra.mxu0 0.0
    %104 = vmatprep.subr.mxu0 0.0
    %105 = vmatpush1.xpose.msra.mxu0 %v72
    %106 = vmatprep.subr.mxu0 0.0
    %107 = vmatpush2.xpose.msra.mxu0 0.0
    %108 = vmatprep.subr.mxu0 0.0
    %109 = vmatpush2.xpose.msra.mxu0 0.0
    %110 = vmatprep.subr.mxu0 0.0
    %111 = vmatpush2.xpose.msra.mxu0 0.0
    %112 = vmatprep.subr.mxu0 0.0
    %113 = vmatpush2.xpose.msra.mxu0 0.0
    %114 = vmatprep.subr.mxu0 0.0
    %115 = vmatpush2.xpose.msra.mxu0 0.0
    %116 = vmatprep.subr.mxu0 0.0
    %117 = vmatpush2.xpose.msra.mxu0 0.0
    %118 = vmatprep.subr.mxu0 0.0
    %119 = vmatpush2.xpose.msra.mxu0 0.0
    %120 = vmatprep.subr.mxu0 0.0
    %121 = vmatpush2.xpose.msra.mxu0 0.0
    %122 = vmatprep.subr.mxu0 0.0
    %123 = vmatpush2.xpose.msra.mxu0 0.0
    %124 = vmatprep.subr.mxu0 0.0
    %125 = vmatpush2.xpose.msra.mxu0 0.0
    %126 = vmatprep.subr.mxu0 0.0
    %127 = vmatpush2.xpose.msra.mxu0 0.0
    %128 = vmatprep.subr.mxu0 0.0
    %129 = vmatpush2.xpose.msra.mxu0 0.0
    %130 = vmatprep.subr.mxu0 0.0
    %131 = vmatpush2.xpose.msra.mxu0 0.0
    %132 = vmatprep.subr.mxu0 0.0
    %133 = vmatpush2.xpose.msra.mxu0 0.0
    %134 = vmatprep.subr.mxu0 0.0
    %135 = vmatpush2.xpose.msra.mxu0 0.0
    %136 = vmatprep.subr.mxu0 0.0
    %137 = vmatpush2.xpose.msra.mxu0 0.0
    %138 = vmatprep.mubr.f32.mxu0 0.0
    %139 = vmatmul.mubr.f32.gmra.mxu0 %v60
    %v140 = vpop.f32.mrf.mxu0
    %v141 = vadd.f32 %v41, %v140
    %v142 = vpop.f32.mrf.mxu0
    %143 = vmatprep.mubr.f32.mxu0 0.0
    %144 = vmatmul.mubr.f32.gmra.mxu0 %v63
    %v145 = vpop.f32.mrf.mxu0
    %v146 = vadd.f32 %v46, %v145
    %v147 = vpop.f32.mrf.mxu0
    %148 = vmatprep.mubr.f32.mxu0 0.0
    %149 = vmatmul.mubr.f32.gmra.mxu0 %v66
    %v150 = vpop.f32.mrf.mxu0
    %v151 = vadd.f32 %v51, %v150
    %v152 = vpop.f32.mrf.mxu0
    %153 = vmatprep.mubr.f32.mxu0 0.0
    %154 = vmatmul.mubr.f32.gmra.mxu0 %v69
    %v155 = vpop.f32.mrf.mxu0
    %v156 = vadd.f32 %v56, %v155
    %v157 = vpop.f32.mrf.mxu0
    %158 = vdwg.mxu0
    %v159 = vtanh.pop %v141
    %v160 = vtanh.pop %v146
    %v161 = vtanh.pop %v151
    %v162 = vtanh.pop %v156
    %v163 = vld [vmem:[%s3] sm:$0xff]
    %v164 = vld [vmem:[%s3 + $0x8] sm:$0xff]
    %v165 = vld [vmem:[%s3 + $0x10] sm:$0xff]
    %v166 = vld [vmem:[%s3 + $0x18] sm:$0x3f]
    %v167 = vld [vmem:[%s4] sm:$0xff]
    %v168 = vld [vmem:[%s4 + $0x8] sm:$0xff]
    %v169 = vld [vmem:[%s4 + $0x10] sm:$0xff]
    %v170 = vld [vmem:[%s4 + $0x18] sm:$0x3f]
    %172 = vset.pattern.permute.xlu0 0
    %173 = vperm.xlu0 %172, %v167
    %v174 = vpop.permute.xlu0 %173
    %177 = vset.pattern.permute.xlu0 0
    %178 = vperm.xlu0 %177, %v168
    %v179 = vpop.permute.xlu0 %178
    %182 = vset.pattern.permute.xlu0 0
    %183 = vperm.xlu0 %182, %v169
    %v184 = vpop.permute.xlu0 %183
    %187 = vset.pattern.permute.xlu0 0
    %188 = vperm.xlu0 %187, %v170
    %v189 = vpop.permute.xlu0 %188
    %vm191 = vcmask 244736
    %v193 = vsel %vm191, %v163, 0
    %v196 = vsel %vm191, %v164, 0
    %v199 = vsel %vm191, %v165, 0
    %v202 = vsel %vm191, %v166, 0
    %vm204 = vcmask 1045504
    %v206 = vsel %vm204, %v162, 0
    %208 = vmatprep.subr.mxu0 0.0
    %209 = vmatpush1.msra.mxu0 0.0
    %210 = vmatprep.subr.mxu0 0.0
    %211 = vmatpush1.msra.mxu0 0.0
    %212 = vmatprep.subr.mxu0 0.0
    %213 = vmatpush1.msra.mxu0 0.0
    %214 = vmatprep.subr.mxu0 0.0
    %215 = vmatpush1.msra.mxu0 0.0
    %216 = vmatprep.subr.mxu0 0.0
    %217 = vmatpush1.msra.mxu0 0.0
    %218 = vmatprep.subr.mxu0 0.0
    %219 = vmatpush1.msra.mxu0 0.0
    %220 = vmatprep.subr.mxu0 0.0
    %221 = vmatpush1.msra.mxu0 0.0
    %222 = vmatprep.subr.mxu0 0.0
    %223 = vmatpush1.msra.mxu0 0.0
    %224 = vmatprep.subr.mxu0 0.0
    %225 = vmatpush1.msra.mxu0 0.0
    %226 = vmatprep.subr.mxu0 0.0
    %227 = vmatpush1.msra.mxu0 0.0
    %228 = vmatprep.subr.mxu0 0.0
    %229 = vmatpush1.msra.mxu0 0.0
    %230 = vmatprep.subr.mxu0 0.0
    %231 = vmatpush1.msra.mxu0 0.0
    %232 = vmatprep.subr.mxu0 0.0
    %233 = vmatpush1.msra.mxu0 %v206
    %234 = vmatprep.subr.mxu0 0.0
    %235 = vmatpush1.msra.mxu0 %v161
    %236 = vmatprep.subr.mxu0 0.0
    %237 = vmatpush1.msra.mxu0 %v160
    %238 = vmatprep.subr.mxu0 0.0
    %239 = vmatpush1.msra.mxu0 %v159
    %240 = vmatprep.subr.mxu0 0.0
    %241 = vmatpush2.msra.mxu0 0.0
    %242 = vmatprep.subr.mxu0 0.0
    %243 = vmatpush2.msra.mxu0 0.0
    %244 = vmatprep.subr.mxu0 0.0
    %245 = vmatpush2.msra.mxu0 0.0
    %246 = vmatprep.subr.mxu0 0.0
    %247 = vmatpush2.msra.mxu0 0.0
    %248 = vmatprep.subr.mxu0 0.0
    %249 = vmatpush2.msra.mxu0 0.0
    %250 = vmatprep.subr.mxu0 0.0
    %251 = vmatpush2.msra.mxu0 0.0
    %252 = vmatprep.subr.mxu0 0.0
    %253 = vmatpush2.msra.mxu0 0.0
    %254 = vmatprep.subr.mxu0 0.0
    %255 = vmatpush2.msra.mxu0 0.0
    %256 = vmatprep.subr.mxu0 0.0
    %257 = vmatpush2.msra.mxu0 0.0
    %258 = vmatprep.subr.mxu0 0.0
    %259 = vmatpush2.msra.mxu0 0.0
    %260 = vmatprep.subr.mxu0 0.0
    %261 = vmatpush2.msra.mxu0 0.0
    %262 = vmatprep.subr.mxu0 0.0
    %263 = vmatpush2.msra.mxu0 0.0
    %264 = vmatprep.subr.mxu0 0.0
    %265 = vmatpush2.msra.mxu0 0.0
    %266 = vmatprep.subr.mxu0 0.0
    %267 = vmatpush2.msra.mxu0 0.0
    %268 = vmatprep.subr.mxu0 0.0
    %269 = vmatpush2.msra.mxu0 0.0
    %270 = vmatprep.subr.mxu0 0.0
    %271 = vmatpush2.msra.mxu0 0.0
    %272 = vmatprep.mubr.f32.mxu0 0.0
    %273 = vmatmul.mubr.f32.gmra.mxu0 %v193
    %v274 = vpop.f32.mrf.mxu0
    %v275 = vadd.f32 %v174, %v274
    %v276 = vpop.f32.mrf.mxu0
    %277 = vmatprep.mubr.f32.mxu0 0.0
    %278 = vmatmul.mubr.f32.gmra.mxu0 %v196
    %v279 = vpop.f32.mrf.mxu0
    %v280 = vadd.f32 %v179, %v279
    %v281 = vpop.f32.mrf.mxu0
    %282 = vmatprep.mubr.f32.mxu0 0.0
    %283 = vmatmul.mubr.f32.gmra.mxu0 %v199
    %v284 = vpop.f32.mrf.mxu0
    %v285 = vadd.f32 %v184, %v284
    %v286 = vpop.f32.mrf.mxu0
    %287 = vmatprep.mubr.f32.mxu0 0.0
    %288 = vmatmul.mubr.f32.gmra.mxu0 %v202
    %v289 = vpop.f32.mrf.mxu0
    %v290 = vadd.f32 %v189, %v289
    %v291 = vpop.f32.mrf.mxu0
    %292 = vdwg.mxu0
    %v293 = vtanh.pop %v275
    %v294 = vtanh.pop %v280
    %v295 = vtanh.pop %v285
    %v296 = vtanh.pop %v290
    %v297 = vld [vmem:[%s5] sm:$0x1]
    %v298 = vld [vmem:[#allocation2] sm:$0x1]
    %300 = vset.pattern.permute.xlu0 0
    %301 = vperm.xlu0 %300, %v298
    %v302 = vpop.permute.xlu0 %301
    %v304 = vlaneseq
    %v305 = vshrl.u32 %v304, 7
    %v306 = vsub.s32 0, %v305
    %v307 = vrot.slane %v302, %v306
    %v309 = vsel %vm191, %v297, 0
    %v312 = vsel %vm204, %v296, 0
    %314 = vmatprep.subr.mxu0 0.0
    %315 = vmatpush1.msra.mxu0 0.0
    %316 = vmatprep.subr.mxu0 0.0
    %317 = vmatpush1.msra.mxu0 0.0
    %318 = vmatprep.subr.mxu0 0.0
    %319 = vmatpush1.msra.mxu0 0.0
    %320 = vmatprep.subr.mxu0 0.0
    %321 = vmatpush1.msra.mxu0 0.0
    %322 = vmatprep.subr.mxu0 0.0
    %323 = vmatpush1.msra.mxu0 0.0
    %324 = vmatprep.subr.mxu0 0.0
    %325 = vmatpush1.msra.mxu0 0.0
    %326 = vmatprep.subr.mxu0 0.0
    %327 = vmatpush1.msra.mxu0 0.0
    %328 = vmatprep.subr.mxu0 0.0
    %329 = vmatpush1.msra.mxu0 0.0
    %330 = vmatprep.subr.mxu0 0.0
    %331 = vmatpush1.msra.mxu0 0.0
    %332 = vmatprep.subr.mxu0 0.0
    %333 = vmatpush1.msra.mxu0 0.0
    %334 = vmatprep.subr.mxu0 0.0
    %335 = vmatpush1.msra.mxu0 0.0
    %336 = vmatprep.subr.mxu0 0.0
    %337 = vmatpush1.msra.mxu0 0.0
    %338 = vmatprep.subr.mxu0 0.0
    %339 = vmatpush1.msra.mxu0 %v312
    %340 = vmatprep.subr.mxu0 0.0
    %341 = vmatpush1.msra.mxu0 %v295
    %342 = vmatprep.subr.mxu0 0.0
    %343 = vmatpush1.msra.mxu0 %v294
    %344 = vmatprep.subr.mxu0 0.0
    %345 = vmatpush1.msra.mxu0 %v293
    %346 = vmatprep.subr.mxu0 0.0
    %347 = vmatpush2.msra.mxu0 0.0
    %348 = vmatprep.subr.mxu0 0.0
    %349 = vmatpush2.msra.mxu0 0.0
    %350 = vmatprep.subr.mxu0 0.0
    %351 = vmatpush2.msra.mxu0 0.0
    %352 = vmatprep.subr.mxu0 0.0
    %353 = vmatpush2.msra.mxu0 0.0
    %354 = vmatprep.subr.mxu0 0.0
    %355 = vmatpush2.msra.mxu0 0.0
    %356 = vmatprep.subr.mxu0 0.0
    %357 = vmatpush2.msra.mxu0 0.0
    %358 = vmatprep.subr.mxu0 0.0
    %359 = vmatpush2.msra.mxu0 0.0
    %360 = vmatprep.subr.mxu0 0.0
    %361 = vmatpush2.msra.mxu0 0.0
    %362 = vmatprep.subr.mxu0 0.0
    %363 = vmatpush2.msra.mxu0 0.0
    %364 = vmatprep.subr.mxu0 0.0
    %365 = vmatpush2.msra.mxu0 0.0
    %366 = vmatprep.subr.mxu0 0.0
    %367 = vmatpush2.msra.mxu0 0.0
    %368 = vmatprep.subr.mxu0 0.0
    %369 = vmatpush2.msra.mxu0 0.0
    %370 = vmatprep.subr.mxu0 0.0
    %371 = vmatpush2.msra.mxu0 0.0
    %372 = vmatprep.subr.mxu0 0.0
    %373 = vmatpush2.msra.mxu0 0.0
    %374 = vmatprep.subr.mxu0 0.0
    %375 = vmatpush2.msra.mxu0 0.0
    %376 = vmatprep.subr.mxu0 0.0
    %377 = vmatpush2.msra.mxu0 0.0
    %378 = vmatprep.mubr.f32.mxu0 0.0
    %379 = vmatmul.mubr.f32.gmra.mxu0 %v309
    %v380 = vpop.f32.mrf.mxu0
    %v381 = vadd.f32 %v307, %v380
    %v382 = vpop.f32.mrf.mxu0
    %383 = vdwg.mxu0
    %vm384 = vcmask 57344
    %385 = vst.msk [vmem:[#allocation3] sm:$0x1] %vm384, %v381
    // Predicated region
    $region30: #{tpu_custom_call.1} parent=1 // pred_check
      _
    $region31: #{tpu_custom_call.1} parent=1 // pred_check_branch
      %387 = sbr.rel (0) target = $region33
    $region32: #{tpu_custom_call.1} parent=1 // pred_region
      %s389 = ssub.s32 16, 16
      %390 = vsyncadd [#allocation4], %s389
      %s392 = sshll.u32 [#allocation3], 4
      %s393 = int_to_ptr.vmem [resolvable:$true] %s392
      %395 = dma.vmem_to_hbm [thread:$0]  %s393, 16, %s7, [#allocation4]
    $region33: #{tpu_custom_call.1} parent=1 // pred_fallthru
      _
    // Predicated region
    $region34: #{tpu_custom_call.1} parent=1 // pred_check
      _
    $region35: #{tpu_custom_call.1} parent=1 // pred_check_branch
      %397 = sbr.rel (0) target = $region37
    $region36: #{tpu_custom_call.1} parent=1 // pred_region
      %398 = dma.done [#allocation4], 16
    $region37: #{tpu_custom_call.1} parent=1 // pred_fallthru
      _
    %399 = vsyncpa [#allocation4], 1

</llo_original>
